<compile_context>
chip_gen: v6e
topology: v6e:2x2x1
jax: 0.10.0
libtpu: 0.0.40
codegen_flags: <defaults>
</compile_context>

<pallas_src>
import math
import numpy as np
import jax
import jax.numpy as jnp
from jax import lax
from jax.experimental import pallas as pl
from jax.experimental.pallas import tpu as pltpu


def _largest_divisor(n, cap):
    """Largest divisor of n that is <= cap (>= 1)."""
    cap = max(1, cap)
    best = 1
    for d in range(1, n + 1):
        if n % d == 0 and d <= cap:
            best = d
    return best


# ----------------------------------------------------------------------------
# Kernel 1: fused channel split -> sequential depthwise 3x3 convs -> concat
# ----------------------------------------------------------------------------
def fused_split_dwconv_cat(x_nhwc, conv_w, conv_b, width, nums, batch_tile=1):
    """x_nhwc (B,H,W,C); conv_w (nums,3,3,width); conv_b (nums,width)."""
    B, H, W, C = x_nhwc.shape
    rem = C - nums * width                      # passthrough channels spx[nums]
    assert rem > 0, "scales must be >= 2 (same restriction as the PyTorch ref)"
    bt = batch_tile
    assert B % bt == 0

    def kernel(x_ref, w_ref, b_ref, o_ref, pad_ref):
        pad_ref[...] = jnp.zeros_like(pad_ref)       # zero halo border (once)
        w = w_ref[...].astype(jnp.float32)           # (nums, 3, 3, width)
        bias = b_ref[...].astype(jnp.float32)        # (nums, width)
        for b in range(bt):
            x = x_ref[b].astype(jnp.float32)         # (H, W, C)
            sp = None
            pieces = []
            for i in range(nums):
                chunk = x[:, :, i * width:(i + 1) * width]
                sp = chunk if i == 0 else sp + chunk
                pad_ref[pl.ds(1, H), pl.ds(1, W), :] = sp     # interior only
                xp = pad_ref[...]                             # (H+2, W+2, width)
                acc = jnp.zeros((H, W, width), jnp.float32)
                for dy in range(3):
                    for dx in range(3):
                        acc = acc + xp[dy:dy + H, dx:dx + W, :] * w[i, dy, dx]
                sp = acc + bias[i]
                pieces.append(sp)
            pieces.append(x[:, :, nums * width:])             # untouched chunk
            o_ref[b] = jnp.concatenate(pieces, axis=-1).astype(o_ref.dtype)

    return pl.pallas_call(
        kernel,
        out_shape=jax.ShapeDtypeStruct((B, H, W, C), x_nhwc.dtype),
        grid=(B // bt,),
        in_specs=[
            pl.BlockSpec((bt, H, W, C), lambda b: (b, 0, 0, 0)),
            pl.BlockSpec((nums, 3, 3, width), lambda b: (0, 0, 0, 0)),
            pl.BlockSpec((nums, width), lambda b: (0, 0)),
        ],
        out_specs=pl.BlockSpec((bt, H, W, C), lambda b: (b, 0, 0, 0)),
        scratch_shapes=[pltpu.VMEM((H + 2, W + 2, width), jnp.float32)],
        compiler_params=pltpu.CompilerParams(dimension_semantics=("parallel",)),
    )(x_nhwc, conv_w, conv_b)


# ----------------------------------------------------------------------------
# Fourier positional-encoding features (batch-invariant, computed once; the
# 1x1 projection to dim is folded into a single additive (N, C) term outside
# the kernel)
# ----------------------------------------------------------------------------
def fourier_pos_features(H, W, hidden_dim=32, temperature=10000.0):
    scale = 2.0 * math.pi
    eps = 1e-6
    y_embed = (jnp.arange(1, H + 1, dtype=jnp.float32) / (H + eps)) * scale
    x_embed = (jnp.arange(1, W + 1, dtype=jnp.float32) / (W + eps)) * scale
    dim_t = jnp.arange(hidden_dim, dtype=jnp.float32)
    dim_t = temperature ** (2.0 * jnp.floor(dim_t / 2.0) / hidden_dim)
    pos_y = jnp.broadcast_to(y_embed[:, None, None] / dim_t, (H, W, hidden_dim))
    pos_x = jnp.broadcast_to(x_embed[None, :, None] / dim_t, (H, W, hidden_dim))

    def interleave(p):
        return jnp.stack((jnp.sin(p[..., 0::2]), jnp.cos(p[..., 1::2])),
                         axis=-1).reshape(H, W, hidden_dim)

    pos = jnp.concatenate([interleave(pos_y), interleave(pos_x)], axis=-1)
    return pos.reshape(H * W, 2 * hidden_dim)          # (N, 2*hidden_dim)


# ----------------------------------------------------------------------------
# Kernel 2: fused BN(eval) + pos add + XCA + BN(eval) + MLP on flattened rows
# ----------------------------------------------------------------------------
def sdta_core(xin_flat, xcat_flat, consts, *, num_heads, seq_len, batch_tile,
              mxu_dtype=jnp.float32):
    M_total, C = xin_flat.shape
    N = seq_len
    bt = batch_tile
    M = bt * N                                  # rows handled per grid step
    dh = C // num_heads
    md = mxu_dtype
    f32 = jnp.float32

    def kernel(xin_ref, xcat_ref, add_ref, bn1s_ref, wqkv_ref, bqkv_ref,
               temp_ref, wpr_ref, bpr_ref, w1_ref, b1_ref, w2_ref, b2_ref,
               out_ref):
        # BN1 (eval, folded) + precomputed (Fourier pos + BN1 shift) add term.
        x2d = xcat_ref[...].astype(f32) * bn1s_ref[0] + add_ref[...]   # (M, C)

        # Fused QKV projection: one (M, C) x (C, 3C) MXU matmul.
        qkv = jnp.dot(x2d.astype(md), wqkv_ref[...],
                      preferred_element_type=f32) + bqkv_ref[0]
        q = qkv[:, 0 * C:1 * C]
        k = qkv[:, 1 * C:2 * C]
        v = qkv[:, 2 * C:3 * C]

        # Static block-diagonal head mask: full-row softmax over C columns is
        # then exactly the per-head softmax (off-block probabilities are 0).
        rh = lax.broadcasted_iota(jnp.int32, (C, C), 0) // dh
        ch = lax.broadcasted_iota(jnp.int32, (C, C), 1) // dh
        onblk = (rh == ch).astype(f32)                         # (C, C)
        mask_add = (onblk - 1.0) * 1e30

        outs = []
        for b in range(bt):        # per-image: full-N reductions / attention
            r0 = b * N
            qb = q[r0:r0 + N, :]
            kb = k[r0:r0 + N, :]
            vb = v[r0:r0 + N, :]
            # F.normalize along tokens (columns of the (N, C) view), eps=1e-12.
            qb = qb * lax.rsqrt(jnp.maximum(
                jnp.sum(qb * qb, axis=0, keepdims=True), 1e-24))
            kb = kb * lax.rsqrt(jnp.maximum(
                jnp.sum(kb * kb, axis=0, keepdims=True), 1e-24))
            qb = qb * temp_ref[0]          # temperature folded into q columns
            logits = lax.dot_general(qb.astype(md), kb.astype(md),
                                     (((0,), (0,)), ((), ())),
                                     preferred_element_type=f32) + mask_add
            logits = logits - jnp.max(logits, axis=-1, keepdims=True)
            p = jnp.exp(logits) * onblk
            p = p / jnp.sum(p, axis=-1, keepdims=True)         # (C, C)
            outs.append(lax.dot_general(vb.astype(md), p.astype(md),
                                        (((1,), (1,)), ((), ())),
                                        preferred_element_type=f32))   # (N, C)
        att = outs[0] if bt == 1 else jnp.concatenate(outs, axis=0)    # (M, C)

        # XCA projection (gamma_xca folded in) + residual.
        x2d = x2d + (jnp.dot(att.astype(md), wpr_ref[...],
                             preferred_element_type=f32) + bpr_ref[0])
        # MLP: BN2 folded into w1/b1, gamma folded into w2/b2, Hardswish.
        h1 = jnp.dot(x2d.astype(md), w1_ref[...],
                     preferred_element_type=f32) + b1_ref[0]
        h1 = h1 * jnp.clip(h1 + 3.0, 0.0, 6.0) * (1.0 / 6.0)
        h2 = jnp.dot(h1.astype(md), w2_ref[...],
                     preferred_element_type=f32) + b2_ref[0]
        # residual with the ORIGINAL module input.
        out_ref[...] = (xin_ref[...].astype(f32) + h2).astype(out_ref.dtype)

    per_tile = pl.BlockSpec((M, C), lambda t: (t, 0))

    def full_spec(a):
        nd = a.ndim
        # constant index_map -> Pallas keeps the block resident (no re-DMA)
        return pl.BlockSpec(a.shape, lambda t: (0,) * nd)

    const_args = (consts["add_term"], consts["bn1_scale"], consts["wqkv"],
                  consts["bqkv"], consts["temp_col"], consts["wprojf"],
                  consts["bprojf"], consts["w1f"], consts["b1f"],
                  consts["w2f"], consts["b2f"])

    return pl.pallas_call(
        kernel,
        out_shape=jax.ShapeDtypeStruct((M_total, C), xin_flat.dtype),
        grid=(M_total // M,),
        in_specs=[per_tile, per_tile] + [full_spec(a) for a in const_args],
        out_specs=per_tile,
        compiler_params=pltpu.CompilerParams(dimension_semantics=("parallel",)),
    )(xin_flat, xcat_flat, *const_args)


# ----------------------------------------------------------------------------
# Full module forward
# ----------------------------------------------------------------------------
def sdta_encoder_bnhs(x_nchw, P, *, mxu_dtype=jnp.float32):
    B, C, H, W = x_nchw.shape
    width, nums, heads = P["width"], P["nums"], P["num_heads"]
    N = H * W
    x_nhwc = jnp.transpose(x_nchw, (0, 2, 3, 1))

    # --- kernel 1: split + sequential depthwise 3x3 convs + concat ----------
    # Batch tile sized so ~4x the per-step tiles stay well under VMEM.
    bt1 = _largest_divisor(B, (4 << 20) // max(1, H * W * C * 4 * 4))
    xcat = fused_split_dwconv_cat(
        x_nhwc, jnp.stack(P["conv_w"]), jnp.stack(P["conv_b"]), width, nums,
        batch_tile=bt1)

    xin_flat = x_nhwc.reshape(B * N, C)
    xcat_flat = xcat.reshape(B * N, C)

    # --- batch-invariant / offline-foldable terms (tiny, one time) ----------
    bt = _largest_divisor(B, max(1, 256 // N))            # bt*N rows per step
    pos = fourier_pos_features(H, W) @ P["wp"] + P["bp"]            # (N, C)
    add_term = jnp.tile(pos + P["bn1_shift"], (bt, 1)).astype(jnp.float32)
    wqkv = jnp.concatenate([P["wq"], P["wk"], P["wv"]], axis=1)     # (C, 3C)
    bqkv = jnp.concatenate([P["bq"], P["bk"], P["bv"]])             # (3C,)
    temp_col = jnp.repeat(P["temp"], C // heads)                    # (C,)
    wprojf = P["wproj"] * P["gamma_xca"][None, :]
    bprojf = P["bproj"] * P["gamma_xca"]
    w1f = P["bn2_scale"][:, None] * P["w1"]
    b1f = P["b1"] + P["bn2_shift"] @ P["w1"]
    w2f = P["w2"] * P["gamma"][None, :]
    b2f = P["b2"] * P["gamma"]

    row = lambda v: v.reshape(1, -1).astype(jnp.float32)
    consts = dict(
        add_term=add_term,
        bn1_scale=row(P["bn1_scale"]),
        wqkv=wqkv.astype(mxu_dtype), bqkv=row(bqkv),
        temp_col=row(temp_col),
        wprojf=wprojf.astype(mxu_dtype), bprojf=row(bprojf),
        w1f=w1f.astype(mxu_dtype), b1f=row(b1f),
        w2f=w2f.astype(mxu_dtype), b2f=row(b2f),
    )

    out_flat = sdta_core(xin_flat, xcat_flat, consts, num_heads=heads,
                         seq_len=N, batch_tile=bt, mxu_dtype=mxu_dtype)
    return jnp.transpose(out_flat.reshape(B, H, W, C), (0, 3, 1, 2))


# ----------------------------------------------------------------------------
# Deterministic parameter init (shapes per SDTAEncoderBNHS.__init__)
# ----------------------------------------------------------------------------
def init_params(key, dim, scales=2, expan_ratio=4, num_heads=8, pos_hidden=32):
    width = max(int(math.ceil(dim / scales)), int(math.floor(dim // scales)))
    nums = 1 if scales == 1 else scales - 1
    keys = iter(jax.random.split(key, 64))
    nk = lambda: next(keys)
    nrm = lambda shape, s=0.05: s * jax.random.normal(nk(), shape, jnp.float32)

    def bn_fold(c):
        w = 1.0 + 0.1 * jax.random.normal(nk(), (c,), jnp.float32)
        b = 0.1 * jax.random.normal(nk(), (c,), jnp.float32)
        mean = 0.1 * jax.random.normal(nk(), (c,), jnp.float32)
        var = jax.random.uniform(nk(), (c,), jnp.float32, minval=0.5, maxval=1.5)
        scale = w / jnp.sqrt(var + 1e-5)
        return scale, b - mean * scale

    P = {"width": width, "nums": nums, "num_heads": num_heads}
    P["conv_w"] = [nrm((3, 3, width), 0.2) for _ in range(nums)]
    P["conv_b"] = [nrm((width,), 0.1) for _ in range(nums)]
    P["bn1_scale"], P["bn1_shift"] = bn_fold(dim)
    P["bn2_scale"], P["bn2_shift"] = bn_fold(dim)
    P["wp"] = nrm((2 * pos_hidden, dim)); P["bp"] = nrm((dim,), 0.02)
    P["wq"] = nrm((dim, dim)); P["bq"] = nrm((dim,), 0.02)
    P["wk"] = nrm((dim, dim)); P["bk"] = nrm((dim,), 0.02)
    P["wv"] = nrm((dim, dim)); P["bv"] = nrm((dim,), 0.02)
    # random positive temperatures so the temperature fold is exercised
    P["temp"] = jax.random.uniform(nk(), (num_heads,), jnp.float32,
                                   minval=0.5, maxval=1.5)
    P["wproj"] = nrm((dim, dim)); P["bproj"] = nrm((dim,), 0.02)
    P["gamma_xca"] = jax.random.uniform(nk(), (dim,), jnp.float32,
                                        minval=0.5, maxval=1.5)
    hid = expan_ratio * dim
    P["w1"] = nrm((dim, hid)); P["b1"] = nrm((hid,), 0.02)
    P["w2"] = nrm((hid, dim)); P["b2"] = nrm((dim,), 0.02)
    P["gamma"] = jax.random.uniform(nk(), (dim,), jnp.float32,
                                    minval=0.5, maxval=1.5)
    return P


# ----------------------------------------------------------------------------
# Pure-JAX reference (unfused, per-head XCA) for the correctness check
# ----------------------------------------------------------------------------
def reference_forward(x_nchw, P):
    B, C, H, W = x_nchw.shape
    width, nums, heads = P["width"], P["nums"], P["num_heads"]
    x_nhwc = jnp.transpose(x_nchw, (0, 2, 3, 1))
    n_chunks = -(-C // width)
    chunks = [x_nhwc[..., i * width:min((i + 1) * width, C)] for i in range(n_chunks)]
    outs, sp = [], None
    for i in range(nums):
        sp = chunks[i] if i == 0 else sp + chunks[i]
        w = P["conv_w"][i][:, :, None, :]          # HWIO for depthwise
        sp = lax.conv_general_dilated(sp, w, (1, 1), "SAME",
                                      dimension_numbers=("NHWC", "HWIO", "NHWC"),
                                      feature_group_count=width) + P["conv_b"][i]
        outs.append(sp)
    xcat = jnp.concatenate(outs + [chunks[nums]], axis=-1)
    N = H * W
    xt = xcat.reshape(B, N, C) * P["bn1_scale"] + P["bn1_shift"]
    pos = fourier_pos_features(H, W) @ P["wp"] + P["bp"]
    xt = xt + pos
    q = xt @ P["wq"] + P["bq"]
    k = xt @ P["wk"] + P["bk"]
    v = xt @ P["wv"] + P["bv"]
    dh = C // heads
    qh = q.reshape(B, N, heads, dh).transpose(0, 2, 3, 1)
    kh = k.reshape(B, N, heads, dh).transpose(0, 2, 3, 1)
    vh = v.reshape(B, N, heads, dh).transpose(0, 2, 3, 1)
    qh = qh / jnp.maximum(jnp.sqrt(jnp.sum(qh * qh, -1, keepdims=True)), 1e-12)
    kh = kh / jnp.maximum(jnp.sqrt(jnp.sum(kh * kh, -1, keepdims=True)), 1e-12)
    attn = jnp.einsum("bhdn,bhen->bhde", qh, kh) * P["temp"][None, :, None, None]
    attn = jax.nn.softmax(attn, axis=-1)
    o = jnp.einsum("bhde,bhen->bhdn", attn, vh)
    o = o.transpose(0, 3, 1, 2).reshape(B, N, C)
    o = o @ P["wproj"] + P["bproj"]
    xt = xt + P["gamma_xca"] * o
    x2 = xt * P["bn2_scale"] + P["bn2_shift"]
    h1 = x2 @ P["w1"] + P["b1"]
    h1 = h1 * jnp.clip(h1 + 3.0, 0.0, 6.0) / 6.0
    h2 = (h1 @ P["w2"] + P["b2"]) * P["gamma"]
    out_tok = x_nhwc.reshape(B, N, C) + h2
    return jnp.transpose(out_tok.reshape(B, H, W, C), (0, 3, 1, 2))


if __name__ == "__main__":
    jax.config.update("jax_default_matmul_precision", "highest")
    key = jax.random.PRNGKey(0)
    kx, kp = jax.random.split(key)
    B, dim, H, W = 2, 64, 8, 8
    x = jax.random.normal(kx, (B, dim, H, W), dtype=jnp.float32)
    P = init_params(kp, dim, scales=2, expan_ratio=4, num_heads=8)

    ref = reference_forward(x, P)

    # f32 MXU-input path (tight check of the restructured kernels).
    out = jax.block_until_ready(sdta_encoder_bnhs(x, P))
    np.testing.assert_allclose(np.asarray(out), np.asarray(ref),
                               rtol=2e-3, atol=2e-3)

    # bf16 MXU-input path (v6e/v7x fast path): f32 accumulation, loose sanity.
    out_bf16 = jax.block_until_ready(
        sdta_encoder_bnhs(x, P, mxu_dtype=jnp.bfloat16))
    np.testing.assert_allclose(np.asarray(out_bf16), np.asarray(ref),
                               rtol=1e-1, atol=1e-1)

    print("KERNEL_OK")
</pallas_src>

<mosaic_0001>
module attributes {stable_mosaic.version = 11 : i64} {
  func.func @kernel(%arg0: i32, %arg1: memref<2x8x8x64xf32, #tpu.memory_space<vmem>>, %arg2: memref<1x3x3x32xf32, #tpu.memory_space<vmem>>, %arg3: memref<1x32xf32, #tpu.memory_space<vmem>>, %arg4: memref<2x8x8x64xf32, #tpu.memory_space<vmem>>, %arg5: memref<10x10x32xf32, #tpu.memory_space<vmem>>) attributes {dimension_semantics = [#tpu.dimension_semantics<parallel>], iteration_bounds = array<i64: 1>, scalar_prefetch = 0 : i64, scratch_operands = 1 : i64, tpu.core_type = #tpu.core_type<tc>, window_params = [{transform_indices = @transform_0, window_bounds = array<i64: 2, 8, 8, 64>}, {pipeline_mode = #tpu.pipeline_mode<synchronous>, transform_indices = @transform_1, window_bounds = array<i64: 1, 3, 3, 32>}, {pipeline_mode = #tpu.pipeline_mode<synchronous>, transform_indices = @transform_2, window_bounds = array<i64: 1, 32>}, {transform_indices = @transform_3, window_bounds = array<i64: 2, 8, 8, 64>}]} {
    %cst = arith.constant 0.000000e+00 : f32
    %0 = vector.broadcast %cst : f32 to vector<10x10x32xf32>
    %c0 = arith.constant 0 : index
    %c0_0 = arith.constant 0 : index
    %c0_1 = arith.constant 0 : index
    %1 = vector.load %arg5[%c0, %c0_0, %c0_1] : memref<10x10x32xf32, #tpu.memory_space<vmem>>, vector<10x10x32xf32>
    tpu.vector_store %arg5[%c0, %c0_0, %c0_1], %0 {strides = array<i32>} : memref<10x10x32xf32, #tpu.memory_space<vmem>>, vector<10x10x32xf32>,
    %c0_2 = arith.constant 0 : index
    %c0_3 = arith.constant 0 : index
    %c0_4 = arith.constant 0 : index
    %c0_5 = arith.constant 0 : index
    %2 = vector.load %arg2[%c0_2, %c0_3, %c0_4, %c0_5] : memref<1x3x3x32xf32, #tpu.memory_space<vmem>>, vector<1x3x3x32xf32>
    %c0_6 = arith.constant 0 : index
    %c0_7 = arith.constant 0 : index
    %3 = vector.load %arg3[%c0_6, %c0_7] : memref<1x32xf32, #tpu.memory_space<vmem>>, vector<1x32xf32>
    %c0_8 = arith.constant 0 : index
    %c0_9 = arith.constant 0 : index
    %c0_10 = arith.constant 0 : index
    %c0_11 = arith.constant 0 : index
    %4 = vector.load %arg1[%c0_8, %c0_9, %c0_10, %c0_11] : memref<2x8x8x64xf32, #tpu.memory_space<vmem>>, vector<1x8x8x64xf32>
    %5 = vector.shape_cast %4 : vector<1x8x8x64xf32> to vector<8x8x64xf32>
    %6 = vector.extract_strided_slice %5 {offsets = [0, 0, 0], sizes = [8, 8, 32], strides = [1, 1, 1]} : vector<8x8x64xf32> to vector<8x8x32xf32>
    %c1 = arith.constant 1 : index
    %c1_12 = arith.constant 1 : index
    %c0_13 = arith.constant 0 : index
    %7 = vector.load %arg5[%c1, %c1_12, %c0_13] : memref<10x10x32xf32, #tpu.memory_space<vmem>>, vector<8x8x32xf32>
    tpu.vector_store %arg5[%c1, %c1_12, %c0_13], %6 {strides = array<i32>} : memref<10x10x32xf32, #tpu.memory_space<vmem>>, vector<8x8x32xf32>,
    %c0_14 = arith.constant 0 : index
    %c0_15 = arith.constant 0 : index
    %c0_16 = arith.constant 0 : index
    %8 = vector.load %arg5[%c0_14, %c0_15, %c0_16] : memref<10x10x32xf32, #tpu.memory_space<vmem>>, vector<10x10x32xf32>
    %cst_17 = arith.constant 0.000000e+00 : f32
    %9 = vector.broadcast %cst_17 : f32 to vector<8x8x32xf32>
    %10 = vector.extract_strided_slice %8 {offsets = [0, 0, 0], sizes = [8, 8, 32], strides = [1, 1, 1]} : vector<10x10x32xf32> to vector<8x8x32xf32>
    %11 = vector.extract_strided_slice %2 {offsets = [0, 0, 0, 0], sizes = [1, 1, 1, 32], strides = [1, 1, 1, 1]} : vector<1x3x3x32xf32> to vector<1x1x1x32xf32>
    %12 = vector.shape_cast %11 : vector<1x1x1x32xf32> to vector<32xf32>
    %13 = vector.shape_cast %12 : vector<32xf32> to vector<1x1x32xf32>
    %14 = vector.broadcast %13 : vector<1x1x32xf32> to vector<8x8x32xf32>
    %15 = arith.mulf %10, %14 : vector<8x8x32xf32>
    %16 = arith.addf %9, %15 : vector<8x8x32xf32>
    %17 = vector.extract_strided_slice %8 {offsets = [0, 1, 0], sizes = [8, 8, 32], strides = [1, 1, 1]} : vector<10x10x32xf32> to vector<8x8x32xf32>
    %18 = vector.extract_strided_slice %2 {offsets = [0, 0, 1, 0], sizes = [1, 1, 1, 32], strides = [1, 1, 1, 1]} : vector<1x3x3x32xf32> to vector<1x1x1x32xf32>
    %19 = vector.shape_cast %18 : vector<1x1x1x32xf32> to vector<32xf32>
    %20 = vector.shape_cast %19 : vector<32xf32> to vector<1x1x32xf32>
    %21 = vector.broadcast %20 : vector<1x1x32xf32> to vector<8x8x32xf32>
    %22 = arith.mulf %17, %21 : vector<8x8x32xf32>
    %23 = arith.addf %16, %22 : vector<8x8x32xf32>
    %24 = vector.extract_strided_slice %8 {offsets = [0, 2, 0], sizes = [8, 8, 32], strides = [1, 1, 1]} : vector<10x10x32xf32> to vector<8x8x32xf32>
    %25 = vector.extract_strided_slice %2 {offsets = [0, 0, 2, 0], sizes = [1, 1, 1, 32], strides = [1, 1, 1, 1]} : vector<1x3x3x32xf32> to vector<1x1x1x32xf32>
    %26 = vector.shape_cast %25 : vector<1x1x1x32xf32> to vector<32xf32>
    %27 = vector.shape_cast %26 : vector<32xf32> to vector<1x1x32xf32>
    %28 = vector.broadcast %27 : vector<1x1x32xf32> to vector<8x8x32xf32>
    %29 = arith.mulf %24, %28 : vector<8x8x32xf32>
    %30 = arith.addf %23, %29 : vector<8x8x32xf32>
    %31 = vector.extract_strided_slice %8 {offsets = [1, 0, 0], sizes = [8, 8, 32], strides = [1, 1, 1]} : vector<10x10x32xf32> to vector<8x8x32xf32>
    %32 = vector.extract_strided_slice %2 {offsets = [0, 1, 0, 0], sizes = [1, 1, 1, 32], strides = [1, 1, 1, 1]} : vector<1x3x3x32xf32> to vector<1x1x1x32xf32>
    %33 = vector.shape_cast %32 : vector<1x1x1x32xf32> to vector<32xf32>
    %34 = vector.shape_cast %33 : vector<32xf32> to vector<1x1x32xf32>
    %35 = vector.broadcast %34 : vector<1x1x32xf32> to vector<8x8x32xf32>
    %36 = arith.mulf %31, %35 : vector<8x8x32xf32>
    %37 = arith.addf %30, %36 : vector<8x8x32xf32>
    %38 = vector.extract_strided_slice %8 {offsets = [1, 1, 0], sizes = [8, 8, 32], strides = [1, 1, 1]} : vector<10x10x32xf32> to vector<8x8x32xf32>
    %39 = vector.extract_strided_slice %2 {offsets = [0, 1, 1, 0], sizes = [1, 1, 1, 32], strides = [1, 1, 1, 1]} : vector<1x3x3x32xf32> to vector<1x1x1x32xf32>
    %40 = vector.shape_cast %39 : vector<1x1x1x32xf32> to vector<32xf32>
    %41 = vector.shape_cast %40 : vector<32xf32> to vector<1x1x32xf32>
    %42 = vector.broadcast %41 : vector<1x1x32xf32> to vector<8x8x32xf32>
    %43 = arith.mulf %38, %42 : vector<8x8x32xf32>
    %44 = arith.addf %37, %43 : vector<8x8x32xf32>
    %45 = vector.extract_strided_slice %8 {offsets = [1, 2, 0], sizes = [8, 8, 32], strides = [1, 1, 1]} : vector<10x10x32xf32> to vector<8x8x32xf32>
    %46 = vector.extract_strided_slice %2 {offsets = [0, 1, 2, 0], sizes = [1, 1, 1, 32], strides = [1, 1, 1, 1]} : vector<1x3x3x32xf32> to vector<1x1x1x32xf32>
    %47 = vector.shape_cast %46 : vector<1x1x1x32xf32> to vector<32xf32>
    %48 = vector.shape_cast %47 : vector<32xf32> to vector<1x1x32xf32>
    %49 = vector.broadcast %48 : vector<1x1x32xf32> to vector<8x8x32xf32>
    %50 = arith.mulf %45, %49 : vector<8x8x32xf32>
    %51 = arith.addf %44, %50 : vector<8x8x32xf32>
    %52 = vector.extract_strided_slice %8 {offsets = [2, 0, 0], sizes = [8, 8, 32], strides = [1, 1, 1]} : vector<10x10x32xf32> to vector<8x8x32xf32>
    %53 = vector.extract_strided_slice %2 {offsets = [0, 2, 0, 0], sizes = [1, 1, 1, 32], strides = [1, 1, 1, 1]} : vector<1x3x3x32xf32> to vector<1x1x1x32xf32>
    %54 = vector.shape_cast %53 : vector<1x1x1x32xf32> to vector<32xf32>
    %55 = vector.shape_cast %54 : vector<32xf32> to vector<1x1x32xf32>
    %56 = vector.broadcast %55 : vector<1x1x32xf32> to vector<8x8x32xf32>
    %57 = arith.mulf %52, %56 : vector<8x8x32xf32>
    %58 = arith.addf %51, %57 : vector<8x8x32xf32>
    %59 = vector.extract_strided_slice %8 {offsets = [2, 1, 0], sizes = [8, 8, 32], strides = [1, 1, 1]} : vector<10x10x32xf32> to vector<8x8x32xf32>
    %60 = vector.extract_strided_slice %2 {offsets = [0, 2, 1, 0], sizes = [1, 1, 1, 32], strides = [1, 1, 1, 1]} : vector<1x3x3x32xf32> to vector<1x1x1x32xf32>
    %61 = vector.shape_cast %60 : vector<1x1x1x32xf32> to vector<32xf32>
    %62 = vector.shape_cast %61 : vector<32xf32> to vector<1x1x32xf32>
    %63 = vector.broadcast %62 : vector<1x1x32xf32> to vector<8x8x32xf32>
    %64 = arith.mulf %59, %63 : vector<8x8x32xf32>
    %65 = arith.addf %58, %64 : vector<8x8x32xf32>
    %66 = vector.extract_strided_slice %8 {offsets = [2, 2, 0], sizes = [8, 8, 32], strides = [1, 1, 1]} : vector<10x10x32xf32> to vector<8x8x32xf32>
    %67 = vector.extract_strided_slice %2 {offsets = [0, 2, 2, 0], sizes = [1, 1, 1, 32], strides = [1, 1, 1, 1]} : vector<1x3x3x32xf32> to vector<1x1x1x32xf32>
    %68 = vector.shape_cast %67 : vector<1x1x1x32xf32> to vector<32xf32>
    %69 = vector.shape_cast %68 : vector<32xf32> to vector<1x1x32xf32>
    %70 = vector.broadcast %69 : vector<1x1x32xf32> to vector<8x8x32xf32>
    %71 = arith.mulf %66, %70 : vector<8x8x32xf32>
    %72 = arith.addf %65, %71 : vector<8x8x32xf32>
    %73 = vector.shape_cast %3 : vector<1x32xf32> to vector<32xf32>
    %74 = vector.shape_cast %73 : vector<32xf32> to vector<1x1x32xf32>
    %75 = vector.broadcast %74 : vector<1x1x32xf32> to vector<8x8x32xf32>
    %76 = arith.addf %72, %75 : vector<8x8x32xf32>
    %77 = vector.extract_strided_slice %5 {offsets = [0, 0, 32], sizes = [8, 8, 32], strides = [1, 1, 1]} : vector<8x8x64xf32> to vector<8x8x32xf32>
    %78 = tpu.concatenate %76, %77 in 2 : vector<8x8x32xf32>, vector<8x8x32xf32> -> vector<8x8x64xf32>
    %c0_18 = arith.constant 0 : index
    %c0_19 = arith.constant 0 : index
    %c0_20 = arith.constant 0 : index
    %c0_21 = arith.constant 0 : index
    %79 = vector.load %arg4[%c0_18, %c0_19, %c0_20, %c0_21] : memref<2x8x8x64xf32, #tpu.memory_space<vmem>>, vector<1x8x8x64xf32>
    %80 = vector.shape_cast %79 : vector<1x8x8x64xf32> to vector<8x8x64xf32>
    %81 = vector.shape_cast %78 : vector<8x8x64xf32> to vector<1x8x8x64xf32>
    tpu.vector_store %arg4[%c0_18, %c0_19, %c0_20, %c0_21], %81 {strides = array<i32>} : memref<2x8x8x64xf32, #tpu.memory_space<vmem>>, vector<1x8x8x64xf32>,
    %c1_22 = arith.constant 1 : index
    %c0_23 = arith.constant 0 : index
    %c0_24 = arith.constant 0 : index
    %c0_25 = arith.constant 0 : index
    %82 = vector.load %arg1[%c1_22, %c0_23, %c0_24, %c0_25] : memref<2x8x8x64xf32, #tpu.memory_space<vmem>>, vector<1x8x8x64xf32>
    %83 = vector.shape_cast %82 : vector<1x8x8x64xf32> to vector<8x8x64xf32>
    %84 = vector.extract_strided_slice %83 {offsets = [0, 0, 0], sizes = [8, 8, 32], strides = [1, 1, 1]} : vector<8x8x64xf32> to vector<8x8x32xf32>
    %c1_26 = arith.constant 1 : index
    %c1_27 = arith.constant 1 : index
    %c0_28 = arith.constant 0 : index
    %85 = vector.load %arg5[%c1_26, %c1_27, %c0_28] : memref<10x10x32xf32, #tpu.memory_space<vmem>>, vector<8x8x32xf32>
    tpu.vector_store %arg5[%c1_26, %c1_27, %c0_28], %84 {strides = array<i32>} : memref<10x10x32xf32, #tpu.memory_space<vmem>>, vector<8x8x32xf32>,
    %c0_29 = arith.constant 0 : index
    %c0_30 = arith.constant 0 : index
    %c0_31 = arith.constant 0 : index
    %86 = vector.load %arg5[%c0_29, %c0_30, %c0_31] : memref<10x10x32xf32, #tpu.memory_space<vmem>>, vector<10x10x32xf32>
    %cst_32 = arith.constant 0.000000e+00 : f32
    %87 = vector.broadcast %cst_32 : f32 to vector<8x8x32xf32>
    %88 = vector.extract_strided_slice %86 {offsets = [0, 0, 0], sizes = [8, 8, 32], strides = [1, 1, 1]} : vector<10x10x32xf32> to vector<8x8x32xf32>
    %89 = vector.extract_strided_slice %2 {offsets = [0, 0, 0, 0], sizes = [1, 1, 1, 32], strides = [1, 1, 1, 1]} : vector<1x3x3x32xf32> to vector<1x1x1x32xf32>
    %90 = vector.shape_cast %89 : vector<1x1x1x32xf32> to vector<32xf32>
    %91 = vector.shape_cast %90 : vector<32xf32> to vector<1x1x32xf32>
    %92 = vector.broadcast %91 : vector<1x1x32xf32> to vector<8x8x32xf32>
    %93 = arith.mulf %88, %92 : vector<8x8x32xf32>
    %94 = arith.addf %87, %93 : vector<8x8x32xf32>
    %95 = vector.extract_strided_slice %86 {offsets = [0, 1, 0], sizes = [8, 8, 32], strides = [1, 1, 1]} : vector<10x10x32xf32> to vector<8x8x32xf32>
    %96 = vector.extract_strided_slice %2 {offsets = [0, 0, 1, 0], sizes = [1, 1, 1, 32], strides = [1, 1, 1, 1]} : vector<1x3x3x32xf32> to vector<1x1x1x32xf32>
    %97 = vector.shape_cast %96 : vector<1x1x1x32xf32> to vector<32xf32>
    %98 = vector.shape_cast %97 : vector<32xf32> to vector<1x1x32xf32>
    %99 = vector.broadcast %98 : vector<1x1x32xf32> to vector<8x8x32xf32>
    %100 = arith.mulf %95, %99 : vector<8x8x32xf32>
    %101 = arith.addf %94, %100 : vector<8x8x32xf32>
    %102 = vector.extract_strided_slice %86 {offsets = [0, 2, 0], sizes = [8, 8, 32], strides = [1, 1, 1]} : vector<10x10x32xf32> to vector<8x8x32xf32>
    %103 = vector.extract_strided_slice %2 {offsets = [0, 0, 2, 0], sizes = [1, 1, 1, 32], strides = [1, 1, 1, 1]} : vector<1x3x3x32xf32> to vector<1x1x1x32xf32>
    %104 = vector.shape_cast %103 : vector<1x1x1x32xf32> to vector<32xf32>
    %105 = vector.shape_cast %104 : vector<32xf32> to vector<1x1x32xf32>
    %106 = vector.broadcast %105 : vector<1x1x32xf32> to vector<8x8x32xf32>
    %107 = arith.mulf %102, %106 : vector<8x8x32xf32>
    %108 = arith.addf %101, %107 : vector<8x8x32xf32>
    %109 = vector.extract_strided_slice %86 {offsets = [1, 0, 0], sizes = [8, 8, 32], strides = [1, 1, 1]} : vector<10x10x32xf32> to vector<8x8x32xf32>
    %110 = vector.extract_strided_slice %2 {offsets = [0, 1, 0, 0], sizes = [1, 1, 1, 32], strides = [1, 1, 1, 1]} : vector<1x3x3x32xf32> to vector<1x1x1x32xf32>
    %111 = vector.shape_cast %110 : vector<1x1x1x32xf32> to vector<32xf32>
    %112 = vector.shape_cast %111 : vector<32xf32> to vector<1x1x32xf32>
    %113 = vector.broadcast %112 : vector<1x1x32xf32> to vector<8x8x32xf32>
    %114 = arith.mulf %109, %113 : vector<8x8x32xf32>
    %115 = arith.addf %108, %114 : vector<8x8x32xf32>
    %116 = vector.extract_strided_slice %86 {offsets = [1, 1, 0], sizes = [8, 8, 32], strides = [1, 1, 1]} : vector<10x10x32xf32> to vector<8x8x32xf32>
    %117 = vector.extract_strided_slice %2 {offsets = [0, 1, 1, 0], sizes = [1, 1, 1, 32], strides = [1, 1, 1, 1]} : vector<1x3x3x32xf32> to vector<1x1x1x32xf32>
    %118 = vector.shape_cast %117 : vector<1x1x1x32xf32> to vector<32xf32>
    %119 = vector.shape_cast %118 : vector<32xf32> to vector<1x1x32xf32>
    %120 = vector.broadcast %119 : vector<1x1x32xf32> to vector<8x8x32xf32>
    %121 = arith.mulf %116, %120 : vector<8x8x32xf32>
    %122 = arith.addf %115, %121 : vector<8x8x32xf32>
    %123 = vector.extract_strided_slice %86 {offsets = [1, 2, 0], sizes = [8, 8, 32], strides = [1, 1, 1]} : vector<10x10x32xf32> to vector<8x8x32xf32>
    %124 = vector.extract_strided_slice %2 {offsets = [0, 1, 2, 0], sizes = [1, 1, 1, 32], strides = [1, 1, 1, 1]} : vector<1x3x3x32xf32> to vector<1x1x1x32xf32>
    %125 = vector.shape_cast %124 : vector<1x1x1x32xf32> to vector<32xf32>
    %126 = vector.shape_cast %125 : vector<32xf32> to vector<1x1x32xf32>
    %127 = vector.broadcast %126 : vector<1x1x32xf32> to vector<8x8x32xf32>
    %128 = arith.mulf %123, %127 : vector<8x8x32xf32>
    %129 = arith.addf %122, %128 : vector<8x8x32xf32>
    %130 = vector.extract_strided_slice %86 {offsets = [2, 0, 0], sizes = [8, 8, 32], strides = [1, 1, 1]} : vector<10x10x32xf32> to vector<8x8x32xf32>
    %131 = vector.extract_strided_slice %2 {offsets = [0, 2, 0, 0], sizes = [1, 1, 1, 32], strides = [1, 1, 1, 1]} : vector<1x3x3x32xf32> to vector<1x1x1x32xf32>
    %132 = vector.shape_cast %131 : vector<1x1x1x32xf32> to vector<32xf32>
    %133 = vector.shape_cast %132 : vector<32xf32> to vector<1x1x32xf32>
    %134 = vector.broadcast %133 : vector<1x1x32xf32> to vector<8x8x32xf32>
    %135 = arith.mulf %130, %134 : vector<8x8x32xf32>
    %136 = arith.addf %129, %135 : vector<8x8x32xf32>
    %137 = vector.extract_strided_slice %86 {offsets = [2, 1, 0], sizes = [8, 8, 32], strides = [1, 1, 1]} : vector<10x10x32xf32> to vector<8x8x32xf32>
    %138 = vector.extract_strided_slice %2 {offsets = [0, 2, 1, 0], sizes = [1, 1, 1, 32], strides = [1, 1, 1, 1]} : vector<1x3x3x32xf32> to vector<1x1x1x32xf32>
    %139 = vector.shape_cast %138 : vector<1x1x1x32xf32> to vector<32xf32>
    %140 = vector.shape_cast %139 : vector<32xf32> to vector<1x1x32xf32>
    %141 = vector.broadcast %140 : vector<1x1x32xf32> to vector<8x8x32xf32>
    %142 = arith.mulf %137, %141 : vector<8x8x32xf32>
    %143 = arith.addf %136, %142 : vector<8x8x32xf32>
    %144 = vector.extract_strided_slice %86 {offsets = [2, 2, 0], sizes = [8, 8, 32], strides = [1, 1, 1]} : vector<10x10x32xf32> to vector<8x8x32xf32>
    %145 = vector.extract_strided_slice %2 {offsets = [0, 2, 2, 0], sizes = [1, 1, 1, 32], strides = [1, 1, 1, 1]} : vector<1x3x3x32xf32> to vector<1x1x1x32xf32>
    %146 = vector.shape_cast %145 : vector<1x1x1x32xf32> to vector<32xf32>
    %147 = vector.shape_cast %146 : vector<32xf32> to vector<1x1x32xf32>
    %148 = vector.broadcast %147 : vector<1x1x32xf32> to vector<8x8x32xf32>
    %149 = arith.mulf %144, %148 : vector<8x8x32xf32>
    %150 = arith.addf %143, %149 : vector<8x8x32xf32>
    %151 = vector.shape_cast %3 : vector<1x32xf32> to vector<32xf32>
    %152 = vector.shape_cast %151 : vector<32xf32> to vector<1x1x32xf32>
    %153 = vector.broadcast %152 : vector<1x1x32xf32> to vector<8x8x32xf32>
    %154 = arith.addf %150, %153 : vector<8x8x32xf32>
    %155 = vector.extract_strided_slice %83 {offsets = [0, 0, 32], sizes = [8, 8, 32], strides = [1, 1, 1]} : vector<8x8x64xf32> to vector<8x8x32xf32>
    %156 = tpu.concatenate %154, %155 in 2 : vector<8x8x32xf32>, vector<8x8x32xf32> -> vector<8x8x64xf32>
    %c1_33 = arith.constant 1 : index
    %c0_34 = arith.constant 0 : index
    %c0_35 = arith.constant 0 : index
    %c0_36 = arith.constant 0 : index
    %157 = vector.load %arg4[%c1_33, %c0_34, %c0_35, %c0_36] : memref<2x8x8x64xf32, #tpu.memory_space<vmem>>, vector<1x8x8x64xf32>
    %158 = vector.shape_cast %157 : vector<1x8x8x64xf32> to vector<8x8x64xf32>
    %159 = vector.shape_cast %156 : vector<8x8x64xf32> to vector<1x8x8x64xf32>
    tpu.vector_store %arg4[%c1_33, %c0_34, %c0_35, %c0_36], %159 {strides = array<i32>} : memref<2x8x8x64xf32, #tpu.memory_space<vmem>>, vector<1x8x8x64xf32>,
    return
  }
  func.func @transform_0(%arg0: i32) -> (i32, i32, i32, i32) {
    %c0_i32 = arith.constant 0 : i32
    %c0_i32_0 = arith.constant 0 : i32
    %c0_i32_1 = arith.constant 0 : i32
    %c0_i32_2 = arith.constant 0 : i32
    return %arg0, %c0_i32, %c0_i32_0, %c0_i32_1 : i32, i32, i32, i32
  }
  func.func @transform_1(%arg0: i32) -> (i32, i32, i32, i32) {
    %c0_i32 = arith.constant 0 : i32
    %c0_i32_0 = arith.constant 0 : i32
    %c0_i32_1 = arith.constant 0 : i32
    %c0_i32_2 = arith.constant 0 : i32
    %c0_i32_3 = arith.constant 0 : i32
    return %c0_i32, %c0_i32_0, %c0_i32_1, %c0_i32_2 : i32, i32, i32, i32
  }
  func.func @transform_2(%arg0: i32) -> (i32, i32) {
    %c0_i32 = arith.constant 0 : i32
    %c0_i32_0 = arith.constant 0 : i32
    %c0_i32_1 = arith.constant 0 : i32
    return %c0_i32, %c0_i32_0 : i32, i32
  }
  func.func @transform_3(%arg0: i32) -> (i32, i32, i32, i32) {
    %c0_i32 = arith.constant 0 : i32
    %c0_i32_0 = arith.constant 0 : i32
    %c0_i32_1 = arith.constant 0 : i32
    %c0_i32_2 = arith.constant 0 : i32
    return %arg0, %c0_i32, %c0_i32_0, %c0_i32_1 : i32, i32, i32, i32
  }
}

</mosaic_0001>

<llo_original>
// kernel: tpu_custom_call.1
$region0: #{tpu_custom_call.1}
  #allocation0 [shape = 'u32[]', space=smem, size = 0x4, offset = 0x4, fixed_abs, tag = 'smem constant byte address 0x4 - core index']
  #allocation1 [shape = 'u32[144,128]{1,0:T(1,128)}', space=vmem, size = 0x12000, scoped, tag = 'internal scratch']
  #allocation2 [shape = 'f32[10,10,32]{2,1,0:T(8,128)}', space=vmem, size = 0x14000, scoped, tag = 'scratch operand']
  %s0 = inlined_call_operand.hbm [shape: f32[2,8,8,64], index: 0, kind: input, shape index: {}]
  %s1 = inlined_call_operand.vmem [shape: f32[1,3,3,32], index: 1, kind: input, shape index: {}]
  %s2 = inlined_call_operand.vmem [shape: f32[1,32], index: 2, kind: input, shape index: {}]
  %s3 = inlined_call_operand.hbm [shape: f32[2,8,8,64], index: 3, kind: output, shape index: {}]
  %s4 = sld [smem:[#allocation0]]
  $region26: #{tpu_custom_call.1} parent=0
    _
  %s6 = ssub.s32 1, %s4
  %s7 = scalar_select 0, %s6, %s4
  $region1: #{tpu_custom_call.1} parent=0
    #allocation3 [shape = 'u8[65536]{0}', space=vmem, size = 0x10000, scoped, tag = 'input window, operand 0, single buffered']
    #allocation4 [shape = 's32[1]{0}', space=sflag, size = 0x4, scoped, tag = 'scoped memory for tpu_custom_call.1']
    #allocation5 [shape = 's32[1]{0}', space=sflag, size = 0x4, scoped, tag = 'scoped memory for tpu_custom_call.1']
    #allocation6 [shape = 'u8[65536]{0}', space=vmem, size = 0x10000, scoped, tag = 'output window, operand 0, single buffered']
    %8 = vsyncpa [#allocation4], 0
    %9 = vsyncpa [#allocation5], 0
    // Predicated region
    $region2: #{tpu_custom_call.1} parent=1 // pred_check
      _
    $region3: #{tpu_custom_call.1} parent=1 // pred_check_branch
      %11 = sbr.rel (0) target = $region5
    $region4: #{tpu_custom_call.1} parent=1 // pred_region
      %s13 = ssub.s32 2048, 2048
      %14 = vsyncadd [#allocation4], %s13
      %s15 = sshll.u32 [#allocation3], 4
      %s16 = int_to_ptr.vmem [resolvable:$true] %s15
      %21 = dma.hbm_to_vmem [thread:$0]  %s0, 2048, %s16, [#allocation4], 128, 128, 8
    $region5: #{tpu_custom_call.1} parent=1 // pred_fallthru
      _
    // Predicated region
    $region6: #{tpu_custom_call.1} parent=1 // pred_check
      _
    $region7: #{tpu_custom_call.1} parent=1 // pred_check_branch
      %23 = sbr.rel (0) target = $region9
    $region8: #{tpu_custom_call.1} parent=1 // pred_region
      _
    $region9: #{tpu_custom_call.1} parent=1 // pred_fallthru
      _
    // Predicated region
    $region10: #{tpu_custom_call.1} parent=1 // pred_check
      _
    $region11: #{tpu_custom_call.1} parent=1 // pred_check_branch
      %25 = sbr.rel (0) target = $region13
    $region12: #{tpu_custom_call.1} parent=1 // pred_region
      _
    $region13: #{tpu_custom_call.1} parent=1 // pred_fallthru
      _
    // Predicated region
    $region14: #{tpu_custom_call.1} parent=1 // pred_check
      _
    $region15: #{tpu_custom_call.1} parent=1 // pred_check_branch
      %27 = sbr.rel (0) target = $region17
    $region16: #{tpu_custom_call.1} parent=1 // pred_region
      %28 = dma.done [#allocation4], 2048
    $region17: #{tpu_custom_call.1} parent=1 // pred_fallthru
      _
    %vm29 = vcmask 261120
    %30 = vst.msk [vmem:[#allocation2] sm:$0xff] %vm29, 0.0
    %vm31 = vcmask 254976
    %32 = vst.msk [vmem:[#allocation2 + $0x8] sm:$0x3] %vm31, 0.0
    %33 = vst.msk [vmem:[#allocation2 + $0x10] sm:$0xff] %vm29, 0.0
    %34 = vst.msk [vmem:[#allocation2 + $0x18] sm:$0x3] %vm31, 0.0
    %35 = vst.msk [vmem:[#allocation2 + $0x20] sm:$0xff] %vm29, 0.0
    %36 = vst.msk [vmem:[#allocation2 + $0x28] sm:$0x3] %vm31, 0.0
    %37 = vst.msk [vmem:[#allocation2 + $0x30] sm:$0xff] %vm29, 0.0
    %38 = vst.msk [vmem:[#allocation2 + $0x38] sm:$0x3] %vm31, 0.0
    %39 = vst.msk [vmem:[#allocation2 + $0x40] sm:$0xff] %vm29, 0.0
    %40 = vst.msk [vmem:[#allocation2 + $0x48] sm:$0x3] %vm31, 0.0
    %41 = vst.msk [vmem:[#allocation2 + $0x50] sm:$0xff] %vm29, 0.0
    %42 = vst.msk [vmem:[#allocation2 + $0x58] sm:$0x3] %vm31, 0.0
    %43 = vst.msk [vmem:[#allocation2 + $0x60] sm:$0xff] %vm29, 0.0
    %44 = vst.msk [vmem:[#allocation2 + $0x68] sm:$0x3] %vm31, 0.0
    %45 = vst.msk [vmem:[#allocation2 + $0x70] sm:$0xff] %vm29, 0.0
    %46 = vst.msk [vmem:[#allocation2 + $0x78] sm:$0x3] %vm31, 0.0
    %47 = vst.msk [vmem:[#allocation2 + $0x80] sm:$0xff] %vm29, 0.0
    %48 = vst.msk [vmem:[#allocation2 + $0x88] sm:$0x3] %vm31, 0.0
    %49 = vst.msk [vmem:[#allocation2 + $0x90] sm:$0xff] %vm29, 0.0
    %50 = vst.msk [vmem:[#allocation2 + $0x98] sm:$0x3] %vm31, 0.0
    %v51 = vld [vmem:[%s1] sm:$0x7]
    %v52 = vld [vmem:[%s1 + $0x4] sm:$0x7]
    %v53 = vld [vmem:[%s1 + $0x8] sm:$0x7]
    %v54 = vld [vmem:[%s2] sm:$0x1]
    %v55 = vld [vmem:[#allocation3] sm:$0xff]
    %v56 = vld [vmem:[#allocation3 + $0x8] sm:$0xff]
    %v57 = vld [vmem:[#allocation3 + $0x10] sm:$0xff]
    %v58 = vld [vmem:[#allocation3 + $0x18] sm:$0xff]
    %v59 = vld [vmem:[#allocation3 + $0x20] sm:$0xff]
    %v60 = vld [vmem:[#allocation3 + $0x28] sm:$0xff]
    %v61 = vld [vmem:[#allocation3 + $0x30] sm:$0xff]
    %v62 = vld [vmem:[#allocation3 + $0x38] sm:$0xff]
    %s63 = scalar_lea.vmem [#allocation2], 16
    %64 = vst.msk [vmem:[%s63 + $0x1] sm:$0xff] %vm29, %v55
    %65 = vst.msk [vmem:[%s63 + $0x11] sm:$0xff] %vm29, %v56
    %66 = vst.msk [vmem:[%s63 + $0x21] sm:$0xff] %vm29, %v57
    %67 = vst.msk [vmem:[%s63 + $0x31] sm:$0xff] %vm29, %v58
    %68 = vst.msk [vmem:[%s63 + $0x41] sm:$0xff] %vm29, %v59
    %69 = vst.msk [vmem:[%s63 + $0x51] sm:$0xff] %vm29, %v60
    %70 = vst.msk [vmem:[%s63 + $0x61] sm:$0xff] %vm29, %v61
    %71 = vst.msk [vmem:[%s63 + $0x71] sm:$0xff] %vm29, %v62
    %v72 = vld [vmem:[#allocation2] sm:$0xff]
    %v73 = vld [vmem:[#allocation2 + $0x8] sm:$0x3]
    %v74 = vld [vmem:[#allocation2 + $0x10] sm:$0xff]
    %v75 = vld [vmem:[#allocation2 + $0x18] sm:$0x3]
    %v76 = vld [vmem:[#allocation2 + $0x20] sm:$0xff]
    %v77 = vld [vmem:[#allocation2 + $0x28] sm:$0x3]
    %v78 = vld [vmem:[#allocation2 + $0x30] sm:$0xff]
    %v79 = vld [vmem:[#allocation2 + $0x38] sm:$0x3]
    %v80 = vld [vmem:[#allocation2 + $0x40] sm:$0xff]
    %v81 = vld [vmem:[#allocation2 + $0x48] sm:$0x3]
    %v82 = vld [vmem:[#allocation2 + $0x50] sm:$0xff]
    %v83 = vld [vmem:[#allocation2 + $0x58] sm:$0x3]
    %v84 = vld [vmem:[#allocation2 + $0x60] sm:$0xff]
    %v85 = vld [vmem:[#allocation2 + $0x68] sm:$0x3]
    %v86 = vld [vmem:[#allocation2 + $0x70] sm:$0xff]
    %v87 = vld [vmem:[#allocation2 + $0x78] sm:$0x3]
    %v88 = vld [vmem:[#allocation2 + $0x80] sm:$0xff]
    %v89 = vld [vmem:[#allocation2 + $0x88] sm:$0x3]
    %v90 = vld [vmem:[#allocation2 + $0x90] sm:$0xff]
    %v91 = vld [vmem:[#allocation2 + $0x98] sm:$0x3]
    %v92 = vlaneseq
    %v93 = vshrl.u32 %v92, 7
    %v94 = vsub.s32 0, %v93
    %v95 = vrot.slane %v51, %v94
    %v96 = vmul.f32 %v72, %v95
    %v97 = vmul.f32 %v74, %v95
    %v98 = vmul.f32 %v76, %v95
    %v99 = vmul.f32 %v78, %v95
    %v100 = vmul.f32 %v80, %v95
    %v101 = vmul.f32 %v82, %v95
    %v102 = vmul.f32 %v84, %v95
    %v103 = vmul.f32 %v86, %v95
    %v104 = vadd.f32 %v96, 0.0
    %v105 = vadd.f32 %v97, 0.0
    %v106 = vadd.f32 %v98, 0.0
    %v107 = vadd.f32 %v99, 0.0
    %v108 = vadd.f32 %v100, 0.0
    %v109 = vadd.f32 %v101, 0.0
    %v110 = vadd.f32 %v102, 0.0
    %v111 = vadd.f32 %v103, 0.0
    %v112 = vlaneseq
    %v113 = vshrl.u32 %v112, 7
    %v114 = vsub.s32 1, %v113
    %v115 = vrot.slane %v51, %v114
    %v116 = vmul.f32 %v72, %v115
    %v117 = vmul.f32 %v73, %v115
    %v118 = vmul.f32 %v74, %v115
    %v119 = vmul.f32 %v75, %v115
    %v120 = vmul.f32 %v76, %v115
    %v121 = vmul.f32 %v77, %v115
    %v122 = vmul.f32 %v78, %v115
    %v123 = vmul.f32 %v79, %v115
    %v124 = vmul.f32 %v80, %v115
    %v125 = vmul.f32 %v81, %v115
    %v126 = vmul.f32 %v82, %v115
    %v127 = vmul.f32 %v83, %v115
    %v128 = vmul.f32 %v84, %v115
    %v129 = vmul.f32 %v85, %v115
    %v130 = vmul.f32 %v86, %v115
    %v131 = vmul.f32 %v87, %v115
    %vm148 = vcmask 1046528
    %v149 = vrot.slane %v116, 1
    %v150 = vrot.slane %v117, 1
    %v151 = vsel %vm148, %v149, %v150
    %v152 = vrot.slane %v118, 1
    %v153 = vrot.slane %v119, 1
    %v154 = vsel %vm148, %v152, %v153
    %v155 = vrot.slane %v120, 1
    %v156 = vrot.slane %v121, 1
    %v157 = vsel %vm148, %v155, %v156
    %v158 = vrot.slane %v122, 1
    %v159 = vrot.slane %v123, 1
    %v160 = vsel %vm148, %v158, %v159
    %v161 = vrot.slane %v124, 1
    %v162 = vrot.slane %v125, 1
    %v163 = vsel %vm148, %v161, %v162
    %v164 = vrot.slane %v126, 1
    %v165 = vrot.slane %v127, 1
    %v166 = vsel %vm148, %v164, %v165
    %v167 = vrot.slane %v128, 1
    %v168 = vrot.slane %v129, 1
    %v169 = vsel %vm148, %v167, %v168
    %v170 = vrot.slane %v130, 1
    %v171 = vrot.slane %v131, 1
    %v172 = vsel %vm148, %v170, %v171
    %v181 = vadd.f32 %v104, %v151
    %v182 = vadd.f32 %v105, %v154
    %v183 = vadd.f32 %v106, %v157
    %v184 = vadd.f32 %v107, %v160
    %v185 = vadd.f32 %v108, %v163
    %v186 = vadd.f32 %v109, %v166
    %v187 = vadd.f32 %v110, %v169
    %v188 = vadd.f32 %v111, %v172
    %v189 = vlaneseq
    %v190 = vshrl.u32 %v189, 7
    %v191 = vsub.s32 2, %v190
    %v192 = vrot.slane %v51, %v191
    %v193 = vmul.f32 %v72, %v192
    %v194 = vmul.f32 %v73, %v192
    %v195 = vmul.f32 %v74, %v192
    %v196 = vmul.f32 %v75, %v192
    %v197 = vmul.f32 %v76, %v192
    %v198 = vmul.f32 %v77, %v192
    %v199 = vmul.f32 %v78, %v192
    %v200 = vmul.f32 %v79, %v192
    %v201 = vmul.f32 %v80, %v192
    %v202 = vmul.f32 %v81, %v192
    %v203 = vmul.f32 %v82, %v192
    %v204 = vmul.f32 %v83, %v192
    %v205 = vmul.f32 %v84, %v192
    %v206 = vmul.f32 %v85, %v192
    %v207 = vmul.f32 %v86, %v192
    %v208 = vmul.f32 %v87, %v192
    %vm225 = vcmask 1045504
    %v226 = vrot.slane %v193, 2
    %v227 = vrot.slane %v194, 2
    %v228 = vsel %vm225, %v226, %v227
    %v229 = vrot.slane %v195, 2
    %v230 = vrot.slane %v196, 2
    %v231 = vsel %vm225, %v229, %v230
    %v232 = vrot.slane %v197, 2
    %v233 = vrot.slane %v198, 2
    %v234 = vsel %vm225, %v232, %v233
    %v235 = vrot.slane %v199, 2
    %v236 = vrot.slane %v200, 2
    %v237 = vsel %vm225, %v235, %v236
    %v238 = vrot.slane %v201, 2
    %v239 = vrot.slane %v202, 2
    %v240 = vsel %vm225, %v238, %v239
    %v241 = vrot.slane %v203, 2
    %v242 = vrot.slane %v204, 2
    %v243 = vsel %vm225, %v241, %v242
    %v244 = vrot.slane %v205, 2
    %v245 = vrot.slane %v206, 2
    %v246 = vsel %vm225, %v244, %v245
    %v247 = vrot.slane %v207, 2
    %v248 = vrot.slane %v208, 2
    %v249 = vsel %vm225, %v247, %v248
    %v258 = vadd.f32 %v181, %v228
    %v259 = vadd.f32 %v182, %v231
    %v260 = vadd.f32 %v183, %v234
    %v261 = vadd.f32 %v184, %v237
    %v262 = vadd.f32 %v185, %v240
    %v263 = vadd.f32 %v186, %v243
    %v264 = vadd.f32 %v187, %v246
    %v265 = vadd.f32 %v188, %v249
    %v266 = vlaneseq
    %v267 = vshrl.u32 %v266, 7
    %v268 = vsub.s32 0, %v267
    %v269 = vrot.slane %v52, %v268
    %v270 = vmul.f32 %v74, %v269
    %v271 = vmul.f32 %v76, %v269
    %v272 = vmul.f32 %v78, %v269
    %v273 = vmul.f32 %v80, %v269
    %v274 = vmul.f32 %v82, %v269
    %v275 = vmul.f32 %v84, %v269
    %v276 = vmul.f32 %v86, %v269
    %v277 = vmul.f32 %v88, %v269
    %v278 = vadd.f32 %v258, %v270
    %v279 = vadd.f32 %v259, %v271
    %v280 = vadd.f32 %v260, %v272
    %v281 = vadd.f32 %v261, %v273
    %v282 = vadd.f32 %v262, %v274
    %v283 = vadd.f32 %v263, %v275
    %v284 = vadd.f32 %v264, %v276
    %v285 = vadd.f32 %v265, %v277
    %v286 = vlaneseq
    %v287 = vshrl.u32 %v286, 7
    %v288 = vsub.s32 1, %v287
    %v289 = vrot.slane %v52, %v288
    %v290 = vmul.f32 %v74, %v289
    %v291 = vmul.f32 %v75, %v289
    %v292 = vmul.f32 %v76, %v289
    %v293 = vmul.f32 %v77, %v289
    %v294 = vmul.f32 %v78, %v289
    %v295 = vmul.f32 %v79, %v289
    %v296 = vmul.f32 %v80, %v289
    %v297 = vmul.f32 %v81, %v289
    %v298 = vmul.f32 %v82, %v289
    %v299 = vmul.f32 %v83, %v289
    %v300 = vmul.f32 %v84, %v289
    %v301 = vmul.f32 %v85, %v289
    %v302 = vmul.f32 %v86, %v289
    %v303 = vmul.f32 %v87, %v289
    %v304 = vmul.f32 %v88, %v289
    %v305 = vmul.f32 %v89, %v289
    %v322 = vrot.slane %v290, 1
    %v323 = vrot.slane %v291, 1
    %v324 = vsel %vm148, %v322, %v323
    %v325 = vrot.slane %v292, 1
    %v326 = vrot.slane %v293, 1
    %v327 = vsel %vm148, %v325, %v326
    %v328 = vrot.slane %v294, 1
    %v329 = vrot.slane %v295, 1
    %v330 = vsel %vm148, %v328, %v329
    %v331 = vrot.slane %v296, 1
    %v332 = vrot.slane %v297, 1
    %v333 = vsel %vm148, %v331, %v332
    %v334 = vrot.slane %v298, 1
    %v335 = vrot.slane %v299, 1
    %v336 = vsel %vm148, %v334, %v335
    %v337 = vrot.slane %v300, 1
    %v338 = vrot.slane %v301, 1
    %v339 = vsel %vm148, %v337, %v338
    %v340 = vrot.slane %v302, 1
    %v341 = vrot.slane %v303, 1
    %v342 = vsel %vm148, %v340, %v341
    %v343 = vrot.slane %v304, 1
    %v344 = vrot.slane %v305, 1
    %v345 = vsel %vm148, %v343, %v344
    %v354 = vadd.f32 %v278, %v324
    %v355 = vadd.f32 %v279, %v327
    %v356 = vadd.f32 %v280, %v330
    %v357 = vadd.f32 %v281, %v333
    %v358 = vadd.f32 %v282, %v336
    %v359 = vadd.f32 %v283, %v339
    %v360 = vadd.f32 %v284, %v342
    %v361 = vadd.f32 %v285, %v345
    %v362 = vlaneseq
    %v363 = vshrl.u32 %v362, 7
    %v364 = vsub.s32 2, %v363
    %v365 = vrot.slane %v52, %v364
    %v366 = vmul.f32 %v74, %v365
    %v367 = vmul.f32 %v75, %v365
    %v368 = vmul.f32 %v76, %v365
    %v369 = vmul.f32 %v77, %v365
    %v370 = vmul.f32 %v78, %v365
    %v371 = vmul.f32 %v79, %v365
    %v372 = vmul.f32 %v80, %v365
    %v373 = vmul.f32 %v81, %v365
    %v374 = vmul.f32 %v82, %v365
    %v375 = vmul.f32 %v83, %v365
    %v376 = vmul.f32 %v84, %v365
    %v377 = vmul.f32 %v85, %v365
    %v378 = vmul.f32 %v86, %v365
    %v379 = vmul.f32 %v87, %v365
    %v380 = vmul.f32 %v88, %v365
    %v381 = vmul.f32 %v89, %v365
    %v398 = vrot.slane %v366, 2
    %v399 = vrot.slane %v367, 2
    %v400 = vsel %vm225, %v398, %v399
    %v401 = vrot.slane %v368, 2
    %v402 = vrot.slane %v369, 2
    %v403 = vsel %vm225, %v401, %v402
    %v404 = vrot.slane %v370, 2
    %v405 = vrot.slane %v371, 2
    %v406 = vsel %vm225, %v404, %v405
    %v407 = vrot.slane %v372, 2
    %v408 = vrot.slane %v373, 2
    %v409 = vsel %vm225, %v407, %v408
    %v410 = vrot.slane %v374, 2
    %v411 = vrot.slane %v375, 2
    %v412 = vsel %vm225, %v410, %v411
    %v413 = vrot.slane %v376, 2
    %v414 = vrot.slane %v377, 2
    %v415 = vsel %vm225, %v413, %v414
    %v416 = vrot.slane %v378, 2
    %v417 = vrot.slane %v379, 2
    %v418 = vsel %vm225, %v416, %v417
    %v419 = vrot.slane %v380, 2
    %v420 = vrot.slane %v381, 2
    %v421 = vsel %vm225, %v419, %v420
    %v430 = vadd.f32 %v354, %v400
    %v431 = vadd.f32 %v355, %v403
    %v432 = vadd.f32 %v356, %v406
    %v433 = vadd.f32 %v357, %v409
    %v434 = vadd.f32 %v358, %v412
    %v435 = vadd.f32 %v359, %v415
    %v436 = vadd.f32 %v360, %v418
    %v437 = vadd.f32 %v361, %v421
    %v438 = vlaneseq
    %v439 = vshrl.u32 %v438, 7
    %v440 = vsub.s32 0, %v439
    %v441 = vrot.slane %v53, %v440
    %v442 = vmul.f32 %v76, %v441
    %v443 = vmul.f32 %v78, %v441
    %v444 = vmul.f32 %v80, %v441
    %v445 = vmul.f32 %v82, %v441
    %v446 = vmul.f32 %v84, %v441
    %v447 = vmul.f32 %v86, %v441
    %v448 = vmul.f32 %v88, %v441
    %v449 = vmul.f32 %v90, %v441
    %v450 = vadd.f32 %v430, %v442
    %v451 = vadd.f32 %v431, %v443
    %v452 = vadd.f32 %v432, %v444
    %v453 = vadd.f32 %v433, %v445
    %v454 = vadd.f32 %v434, %v446
    %v455 = vadd.f32 %v435, %v447
    %v456 = vadd.f32 %v436, %v448
    %v457 = vadd.f32 %v437, %v449
    %v458 = vlaneseq
    %v459 = vshrl.u32 %v458, 7
    %v460 = vsub.s32 1, %v459
    %v461 = vrot.slane %v53, %v460
    %v462 = vmul.f32 %v76, %v461
    %v463 = vmul.f32 %v77, %v461
    %v464 = vmul.f32 %v78, %v461
    %v465 = vmul.f32 %v79, %v461
    %v466 = vmul.f32 %v80, %v461
    %v467 = vmul.f32 %v81, %v461
    %v468 = vmul.f32 %v82, %v461
    %v469 = vmul.f32 %v83, %v461
    %v470 = vmul.f32 %v84, %v461
    %v471 = vmul.f32 %v85, %v461
    %v472 = vmul.f32 %v86, %v461
    %v473 = vmul.f32 %v87, %v461
    %v474 = vmul.f32 %v88, %v461
    %v475 = vmul.f32 %v89, %v461
    %v476 = vmul.f32 %v90, %v461
    %v477 = vmul.f32 %v91, %v461
    %v494 = vrot.slane %v462, 1
    %v495 = vrot.slane %v463, 1
    %v496 = vsel %vm148, %v494, %v495
    %v497 = vrot.slane %v464, 1
    %v498 = vrot.slane %v465, 1
    %v499 = vsel %vm148, %v497, %v498
    %v500 = vrot.slane %v466, 1
    %v501 = vrot.slane %v467, 1
    %v502 = vsel %vm148, %v500, %v501
    %v503 = vrot.slane %v468, 1
    %v504 = vrot.slane %v469, 1
    %v505 = vsel %vm148, %v503, %v504
    %v506 = vrot.slane %v470, 1
    %v507 = vrot.slane %v471, 1
    %v508 = vsel %vm148, %v506, %v507
    %v509 = vrot.slane %v472, 1
    %v510 = vrot.slane %v473, 1
    %v511 = vsel %vm148, %v509, %v510
    %v512 = vrot.slane %v474, 1
    %v513 = vrot.slane %v475, 1
    %v514 = vsel %vm148, %v512, %v513
    %v515 = vrot.slane %v476, 1
    %v516 = vrot.slane %v477, 1
    %v517 = vsel %vm148, %v515, %v516
    %v526 = vadd.f32 %v450, %v496
    %v527 = vadd.f32 %v451, %v499
    %v528 = vadd.f32 %v452, %v502
    %v529 = vadd.f32 %v453, %v505
    %v530 = vadd.f32 %v454, %v508
    %v531 = vadd.f32 %v455, %v511
    %v532 = vadd.f32 %v456, %v514
    %v533 = vadd.f32 %v457, %v517
    %v534 = vlaneseq
    %v535 = vshrl.u32 %v534, 7
    %v536 = vsub.s32 2, %v535
    %v537 = vrot.slane %v53, %v536
    %v538 = vmul.f32 %v76, %v537
    %v539 = vmul.f32 %v77, %v537
    %v540 = vmul.f32 %v78, %v537
    %v541 = vmul.f32 %v79, %v537
    %v542 = vmul.f32 %v80, %v537
    %v543 = vmul.f32 %v81, %v537
    %v544 = vmul.f32 %v82, %v537
    %v545 = vmul.f32 %v83, %v537
    %v546 = vmul.f32 %v84, %v537
    %v547 = vmul.f32 %v85, %v537
    %v548 = vmul.f32 %v86, %v537
    %v549 = vmul.f32 %v87, %v537
    %v550 = vmul.f32 %v88, %v537
    %v551 = vmul.f32 %v89, %v537
    %v552 = vmul.f32 %v90, %v537
    %v553 = vmul.f32 %v91, %v537
    %v570 = vrot.slane %v538, 2
    %v571 = vrot.slane %v539, 2
    %v572 = vsel %vm225, %v570, %v571
    %v573 = vrot.slane %v540, 2
    %v574 = vrot.slane %v541, 2
    %v575 = vsel %vm225, %v573, %v574
    %v576 = vrot.slane %v542, 2
    %v577 = vrot.slane %v543, 2
    %v578 = vsel %vm225, %v576, %v577
    %v579 = vrot.slane %v544, 2
    %v580 = vrot.slane %v545, 2
    %v581 = vsel %vm225, %v579, %v580
    %v582 = vrot.slane %v546, 2
    %v583 = vrot.slane %v547, 2
    %v584 = vsel %vm225, %v582, %v583
    %v585 = vrot.slane %v548, 2
    %v586 = vrot.slane %v549, 2
    %v587 = vsel %vm225, %v585, %v586
    %v588 = vrot.slane %v550, 2
    %v589 = vrot.slane %v551, 2
    %v590 = vsel %vm225, %v588, %v589
    %v591 = vrot.slane %v552, 2
    %v592 = vrot.slane %v553, 2
    %v593 = vsel %vm225, %v591, %v592
    %v602 = vadd.f32 %v526, %v572
    %v603 = vadd.f32 %v527, %v575
    %v604 = vadd.f32 %v528, %v578
    %v605 = vadd.f32 %v529, %v581
    %v606 = vadd.f32 %v530, %v584
    %v607 = vadd.f32 %v531, %v587
    %v608 = vadd.f32 %v532, %v590
    %v609 = vadd.f32 %v533, %v593
    %v611 = vlaneseq
    %v612 = vshrl.u32 %v611, 7
    %v613 = vsub.s32 0, %v612
    %v614 = vrot.slane %v54, %v613
    %v616 = vadd.f32 %v602, %v614
    %v617 = vadd.f32 %v603, %v614
    %v618 = vadd.f32 %v604, %v614
    %v619 = vadd.f32 %v605, %v614
    %v620 = vadd.f32 %v606, %v614
    %v621 = vadd.f32 %v607, %v614
    %v622 = vadd.f32 %v608, %v614
    %v623 = vadd.f32 %v609, %v614
    %v624 = vsel %vm29, %v616, %v55
    %v625 = vsel %vm29, %v617, %v56
    %v626 = vsel %vm29, %v618, %v57
    %v627 = vsel %vm29, %v619, %v58
    %v628 = vsel %vm29, %v620, %v59
    %v629 = vsel %vm29, %v621, %v60
    %v630 = vsel %vm29, %v622, %v61
    %v631 = vsel %vm29, %v623, %v62
    %vm632 = vcmask 523264
    %633 = vst.msk [vmem:[#allocation6] sm:$0xff] %vm632, %v624
    %634 = vst.msk [vmem:[#allocation6 + $0x8] sm:$0xff] %vm632, %v625
    %635 = vst.msk [vmem:[#allocation6 + $0x10] sm:$0xff] %vm632, %v626
    %636 = vst.msk [vmem:[#allocation6 + $0x18] sm:$0xff] %vm632, %v627
    %637 = vst.msk [vmem:[#allocation6 + $0x20] sm:$0xff] %vm632, %v628
    %638 = vst.msk [vmem:[#allocation6 + $0x28] sm:$0xff] %vm632, %v629
    %639 = vst.msk [vmem:[#allocation6 + $0x30] sm:$0xff] %vm632, %v630
    %640 = vst.msk [vmem:[#allocation6 + $0x38] sm:$0xff] %vm632, %v631
    %s641 = scalar_lea.vmem [#allocation3], 64
    %v642 = vld [vmem:[%s641] sm:$0xff]
    %v643 = vld [vmem:[%s641 + $0x8] sm:$0xff]
    %v644 = vld [vmem:[%s641 + $0x10] sm:$0xff]
    %v645 = vld [vmem:[%s641 + $0x18] sm:$0xff]
    %v646 = vld [vmem:[%s641 + $0x20] sm:$0xff]
    %v647 = vld [vmem:[%s641 + $0x28] sm:$0xff]
    %v648 = vld [vmem:[%s641 + $0x30] sm:$0xff]
    %v649 = vld [vmem:[%s641 + $0x38] sm:$0xff]
    %650 = vst.msk [vmem:[%s63 + $0x1] sm:$0xff] %vm29, %v642
    %651 = vst.msk [vmem:[%s63 + $0x11] sm:$0xff] %vm29, %v643
    %652 = vst.msk [vmem:[%s63 + $0x21] sm:$0xff] %vm29, %v644
    %653 = vst.msk [vmem:[%s63 + $0x31] sm:$0xff] %vm29, %v645
    %654 = vst.msk [vmem:[%s63 + $0x41] sm:$0xff] %vm29, %v646
    %655 = vst.msk [vmem:[%s63 + $0x51] sm:$0xff] %vm29, %v647
    %656 = vst.msk [vmem:[%s63 + $0x61] sm:$0xff] %vm29, %v648
    %657 = vst.msk [vmem:[%s63 + $0x71] sm:$0xff] %vm29, %v649
    %v658 = vld [vmem:[#allocation2] sm:$0xff]
    %v659 = vld [vmem:[#allocation2 + $0x8] sm:$0x3]
    %v660 = vld [vmem:[#allocation2 + $0x10] sm:$0xff]
    %v661 = vld [vmem:[#allocation2 + $0x18] sm:$0x3]
    %v662 = vld [vmem:[#allocation2 + $0x20] sm:$0xff]
    %v663 = vld [vmem:[#allocation2 + $0x28] sm:$0x3]
    %v664 = vld [vmem:[#allocation2 + $0x30] sm:$0xff]
    %v665 = vld [vmem:[#allocation2 + $0x38] sm:$0x3]
    %v666 = vld [vmem:[#allocation2 + $0x40] sm:$0xff]
    %v667 = vld [vmem:[#allocation2 + $0x48] sm:$0x3]
    %v668 = vld [vmem:[#allocation2 + $0x50] sm:$0xff]
    %v669 = vld [vmem:[#allocation2 + $0x58] sm:$0x3]
    %v670 = vld [vmem:[#allocation2 + $0x60] sm:$0xff]
    %v671 = vld [vmem:[#allocation2 + $0x68] sm:$0x3]
    %v672 = vld [vmem:[#allocation2 + $0x70] sm:$0xff]
    %v673 = vld [vmem:[#allocation2 + $0x78] sm:$0x3]
    %v674 = vld [vmem:[#allocation2 + $0x80] sm:$0xff]
    %v675 = vld [vmem:[#allocation2 + $0x88] sm:$0x3]
    %v676 = vld [vmem:[#allocation2 + $0x90] sm:$0xff]
    %v677 = vld [vmem:[#allocation2 + $0x98] sm:$0x3]
    %v678 = vmul.f32 %v658, %v95
    %v679 = vmul.f32 %v660, %v95
    %v680 = vmul.f32 %v662, %v95
    %v681 = vmul.f32 %v664, %v95
    %v682 = vmul.f32 %v666, %v95
    %v683 = vmul.f32 %v668, %v95
    %v684 = vmul.f32 %v670, %v95
    %v685 = vmul.f32 %v672, %v95
    %v686 = vadd.f32 %v678, 0.0
    %v687 = vadd.f32 %v679, 0.0
    %v688 = vadd.f32 %v680, 0.0
    %v689 = vadd.f32 %v681, 0.0
    %v690 = vadd.f32 %v682, 0.0
    %v691 = vadd.f32 %v683, 0.0
    %v692 = vadd.f32 %v684, 0.0
    %v693 = vadd.f32 %v685, 0.0
    %v694 = vmul.f32 %v658, %v115
    %v695 = vmul.f32 %v659, %v115
    %v696 = vmul.f32 %v660, %v115
    %v697 = vmul.f32 %v661, %v115
    %v698 = vmul.f32 %v662, %v115
    %v699 = vmul.f32 %v663, %v115
    %v700 = vmul.f32 %v664, %v115
    %v701 = vmul.f32 %v665, %v115
    %v702 = vmul.f32 %v666, %v115
    %v703 = vmul.f32 %v667, %v115
    %v704 = vmul.f32 %v668, %v115
    %v705 = vmul.f32 %v669, %v115
    %v706 = vmul.f32 %v670, %v115
    %v707 = vmul.f32 %v671, %v115
    %v708 = vmul.f32 %v672, %v115
    %v709 = vmul.f32 %v673, %v115
    %v726 = vrot.slane %v694, 1
    %v727 = vrot.slane %v695, 1
    %v728 = vsel %vm148, %v726, %v727
    %v729 = vrot.slane %v696, 1
    %v730 = vrot.slane %v697, 1
    %v731 = vsel %vm148, %v729, %v730
    %v732 = vrot.slane %v698, 1
    %v733 = vrot.slane %v699, 1
    %v734 = vsel %vm148, %v732, %v733
    %v735 = vrot.slane %v700, 1
    %v736 = vrot.slane %v701, 1
    %v737 = vsel %vm148, %v735, %v736
    %v738 = vrot.slane %v702, 1
    %v739 = vrot.slane %v703, 1
    %v740 = vsel %vm148, %v738, %v739
    %v741 = vrot.slane %v704, 1
    %v742 = vrot.slane %v705, 1
    %v743 = vsel %vm148, %v741, %v742
    %v744 = vrot.slane %v706, 1
    %v745 = vrot.slane %v707, 1
    %v746 = vsel %vm148, %v744, %v745
    %v747 = vrot.slane %v708, 1
    %v748 = vrot.slane %v709, 1
    %v749 = vsel %vm148, %v747, %v748
    %v758 = vadd.f32 %v686, %v728
    %v759 = vadd.f32 %v687, %v731
    %v760 = vadd.f32 %v688, %v734
    %v761 = vadd.f32 %v689, %v737
    %v762 = vadd.f32 %v690, %v740
    %v763 = vadd.f32 %v691, %v743
    %v764 = vadd.f32 %v692, %v746
    %v765 = vadd.f32 %v693, %v749
    %v766 = vmul.f32 %v658, %v192
    %v767 = vmul.f32 %v659, %v192
    %v768 = vmul.f32 %v660, %v192
    %v769 = vmul.f32 %v661, %v192
    %v770 = vmul.f32 %v662, %v192
    %v771 = vmul.f32 %v663, %v192
    %v772 = vmul.f32 %v664, %v192
    %v773 = vmul.f32 %v665, %v192
    %v774 = vmul.f32 %v666, %v192
    %v775 = vmul.f32 %v667, %v192
    %v776 = vmul.f32 %v668, %v192
    %v777 = vmul.f32 %v669, %v192
    %v778 = vmul.f32 %v670, %v192
    %v779 = vmul.f32 %v671, %v192
    %v780 = vmul.f32 %v672, %v192
    %v781 = vmul.f32 %v673, %v192
    %v798 = vrot.slane %v766, 2
    %v799 = vrot.slane %v767, 2
    %v800 = vsel %vm225, %v798, %v799
    %v801 = vrot.slane %v768, 2
    %v802 = vrot.slane %v769, 2
    %v803 = vsel %vm225, %v801, %v802
    %v804 = vrot.slane %v770, 2
    %v805 = vrot.slane %v771, 2
    %v806 = vsel %vm225, %v804, %v805
    %v807 = vrot.slane %v772, 2
    %v808 = vrot.slane %v773, 2
    %v809 = vsel %vm225, %v807, %v808
    %v810 = vrot.slane %v774, 2
    %v811 = vrot.slane %v775, 2
    %v812 = vsel %vm225, %v810, %v811
    %v813 = vrot.slane %v776, 2
    %v814 = vrot.slane %v777, 2
    %v815 = vsel %vm225, %v813, %v814
    %v816 = vrot.slane %v778, 2
    %v817 = vrot.slane %v779, 2
    %v818 = vsel %vm225, %v816, %v817
    %v819 = vrot.slane %v780, 2
    %v820 = vrot.slane %v781, 2
    %v821 = vsel %vm225, %v819, %v820
    %v830 = vadd.f32 %v758, %v800
    %v831 = vadd.f32 %v759, %v803
    %v832 = vadd.f32 %v760, %v806
    %v833 = vadd.f32 %v761, %v809
    %v834 = vadd.f32 %v762, %v812
    %v835 = vadd.f32 %v763, %v815
    %v836 = vadd.f32 %v764, %v818
    %v837 = vadd.f32 %v765, %v821
    %v838 = vmul.f32 %v660, %v269
    %v839 = vmul.f32 %v662, %v269
    %v840 = vmul.f32 %v664, %v269
    %v841 = vmul.f32 %v666, %v269
    %v842 = vmul.f32 %v668, %v269
    %v843 = vmul.f32 %v670, %v269
    %v844 = vmul.f32 %v672, %v269
    %v845 = vmul.f32 %v674, %v269
    %v846 = vadd.f32 %v830, %v838
    %v847 = vadd.f32 %v831, %v839
    %v848 = vadd.f32 %v832, %v840
    %v849 = vadd.f32 %v833, %v841
    %v850 = vadd.f32 %v834, %v842
    %v851 = vadd.f32 %v835, %v843
    %v852 = vadd.f32 %v836, %v844
    %v853 = vadd.f32 %v837, %v845
    %v854 = vmul.f32 %v660, %v289
    %v855 = vmul.f32 %v661, %v289
    %v856 = vmul.f32 %v662, %v289
    %v857 = vmul.f32 %v663, %v289
    %v858 = vmul.f32 %v664, %v289
    %v859 = vmul.f32 %v665, %v289
    %v860 = vmul.f32 %v666, %v289
    %v861 = vmul.f32 %v667, %v289
    %v862 = vmul.f32 %v668, %v289
    %v863 = vmul.f32 %v669, %v289
    %v864 = vmul.f32 %v670, %v289
    %v865 = vmul.f32 %v671, %v289
    %v866 = vmul.f32 %v672, %v289
    %v867 = vmul.f32 %v673, %v289
    %v868 = vmul.f32 %v674, %v289
    %v869 = vmul.f32 %v675, %v289
    %v886 = vrot.slane %v854, 1
    %v887 = vrot.slane %v855, 1
    %v888 = vsel %vm148, %v886, %v887
    %v889 = vrot.slane %v856, 1
    %v890 = vrot.slane %v857, 1
    %v891 = vsel %vm148, %v889, %v890
    %v892 = vrot.slane %v858, 1
    %v893 = vrot.slane %v859, 1
    %v894 = vsel %vm148, %v892, %v893
    %v895 = vrot.slane %v860, 1
    %v896 = vrot.slane %v861, 1
    %v897 = vsel %vm148, %v895, %v896
    %v898 = vrot.slane %v862, 1
    %v899 = vrot.slane %v863, 1
    %v900 = vsel %vm148, %v898, %v899
    %v901 = vrot.slane %v864, 1
    %v902 = vrot.slane %v865, 1
    %v903 = vsel %vm148, %v901, %v902
    %v904 = vrot.slane %v866, 1
    %v905 = vrot.slane %v867, 1
    %v906 = vsel %vm148, %v904, %v905
    %v907 = vrot.slane %v868, 1
    %v908 = vrot.slane %v869, 1
    %v909 = vsel %vm148, %v907, %v908
    %v918 = vadd.f32 %v846, %v888
    %v919 = vadd.f32 %v847, %v891
    %v920 = vadd.f32 %v848, %v894
    %v921 = vadd.f32 %v849, %v897
    %v922 = vadd.f32 %v850, %v900
    %v923 = vadd.f32 %v851, %v903
    %v924 = vadd.f32 %v852, %v906
    %v925 = vadd.f32 %v853, %v909
    %v926 = vmul.f32 %v660, %v365
    %v927 = vmul.f32 %v661, %v365
    %v928 = vmul.f32 %v662, %v365
    %v929 = vmul.f32 %v663, %v365
    %v930 = vmul.f32 %v664, %v365
    %v931 = vmul.f32 %v665, %v365
    %v932 = vmul.f32 %v666, %v365
    %v933 = vmul.f32 %v667, %v365
    %v934 = vmul.f32 %v668, %v365
    %v935 = vmul.f32 %v669, %v365
    %v936 = vmul.f32 %v670, %v365
    %v937 = vmul.f32 %v671, %v365
    %v938 = vmul.f32 %v672, %v365
    %v939 = vmul.f32 %v673, %v365
    %v940 = vmul.f32 %v674, %v365
    %v941 = vmul.f32 %v675, %v365
    %v958 = vrot.slane %v926, 2
    %v959 = vrot.slane %v927, 2
    %v960 = vsel %vm225, %v958, %v959
    %v961 = vrot.slane %v928, 2
    %v962 = vrot.slane %v929, 2
    %v963 = vsel %vm225, %v961, %v962
    %v964 = vrot.slane %v930, 2
    %v965 = vrot.slane %v931, 2
    %v966 = vsel %vm225, %v964, %v965
    %v967 = vrot.slane %v932, 2
    %v968 = vrot.slane %v933, 2
    %v969 = vsel %vm225, %v967, %v968
    %v970 = vrot.slane %v934, 2
    %v971 = vrot.slane %v935, 2
    %v972 = vsel %vm225, %v970, %v971
    %v973 = vrot.slane %v936, 2
    %v974 = vrot.slane %v937, 2
    %v975 = vsel %vm225, %v973, %v974
    %v976 = vrot.slane %v938, 2
    %v977 = vrot.slane %v939, 2
    %v978 = vsel %vm225, %v976, %v977
    %v979 = vrot.slane %v940, 2
    %v980 = vrot.slane %v941, 2
    %v981 = vsel %vm225, %v979, %v980
    %v990 = vadd.f32 %v918, %v960
    %v991 = vadd.f32 %v919, %v963
    %v992 = vadd.f32 %v920, %v966
    %v993 = vadd.f32 %v921, %v969
    %v994 = vadd.f32 %v922, %v972
    %v995 = vadd.f32 %v923, %v975
    %v996 = vadd.f32 %v924, %v978
    %v997 = vadd.f32 %v925, %v981
    %v998 = vmul.f32 %v662, %v441
    %v999 = vmul.f32 %v664, %v441
    %v1000 = vmul.f32 %v666, %v441
    %v1001 = vmul.f32 %v668, %v441
    %v1002 = vmul.f32 %v670, %v441
    %v1003 = vmul.f32 %v672, %v441
    %v1004 = vmul.f32 %v674, %v441
    %v1005 = vmul.f32 %v676, %v441
    %v1006 = vadd.f32 %v990, %v998
    %v1007 = vadd.f32 %v991, %v999
    %v1008 = vadd.f32 %v992, %v1000
    %v1009 = vadd.f32 %v993, %v1001
    %v1010 = vadd.f32 %v994, %v1002
    %v1011 = vadd.f32 %v995, %v1003
    %v1012 = vadd.f32 %v996, %v1004
    %v1013 = vadd.f32 %v997, %v1005
    %v1014 = vmul.f32 %v662, %v461
    %v1015 = vmul.f32 %v663, %v461
    %v1016 = vmul.f32 %v664, %v461
    %v1017 = vmul.f32 %v665, %v461
    %v1018 = vmul.f32 %v666, %v461
    %v1019 = vmul.f32 %v667, %v461
    %v1020 = vmul.f32 %v668, %v461
    %v1021 = vmul.f32 %v669, %v461
    %v1022 = vmul.f32 %v670, %v461
    %v1023 = vmul.f32 %v671, %v461
    %v1024 = vmul.f32 %v672, %v461
    %v1025 = vmul.f32 %v673, %v461
    %v1026 = vmul.f32 %v674, %v461
    %v1027 = vmul.f32 %v675, %v461
    %v1028 = vmul.f32 %v676, %v461
    %v1029 = vmul.f32 %v677, %v461
    %v1046 = vrot.slane %v1014, 1
    %v1047 = vrot.slane %v1015, 1
    %v1048 = vsel %vm148, %v1046, %v1047
    %v1049 = vrot.slane %v1016, 1
    %v1050 = vrot.slane %v1017, 1
    %v1051 = vsel %vm148, %v1049, %v1050
    %v1052 = vrot.slane %v1018, 1
    %v1053 = vrot.slane %v1019, 1
    %v1054 = vsel %vm148, %v1052, %v1053
    %v1055 = vrot.slane %v1020, 1
    %v1056 = vrot.slane %v1021, 1
    %v1057 = vsel %vm148, %v1055, %v1056
    %v1058 = vrot.slane %v1022, 1
    %v1059 = vrot.slane %v1023, 1
    %v1060 = vsel %vm148, %v1058, %v1059
    %v1061 = vrot.slane %v1024, 1
    %v1062 = vrot.slane %v1025, 1
    %v1063 = vsel %vm148, %v1061, %v1062
    %v1064 = vrot.slane %v1026, 1
    %v1065 = vrot.slane %v1027, 1
    %v1066 = vsel %vm148, %v1064, %v1065
    %v1067 = vrot.slane %v1028, 1
    %v1068 = vrot.slane %v1029, 1
    %v1069 = vsel %vm148, %v1067, %v1068
    %v1078 = vadd.f32 %v1006, %v1048
    %v1079 = vadd.f32 %v1007, %v1051
    %v1080 = vadd.f32 %v1008, %v1054
    %v1081 = vadd.f32 %v1009, %v1057
    %v1082 = vadd.f32 %v1010, %v1060
    %v1083 = vadd.f32 %v1011, %v1063
    %v1084 = vadd.f32 %v1012, %v1066
    %v1085 = vadd.f32 %v1013, %v1069
    %v1086 = vmul.f32 %v662, %v537
    %v1087 = vmul.f32 %v663, %v537
    %v1088 = vmul.f32 %v664, %v537
    %v1089 = vmul.f32 %v665, %v537
    %v1090 = vmul.f32 %v666, %v537
    %v1091 = vmul.f32 %v667, %v537
    %v1092 = vmul.f32 %v668, %v537
    %v1093 = vmul.f32 %v669, %v537
    %v1094 = vmul.f32 %v670, %v537
    %v1095 = vmul.f32 %v671, %v537
    %v1096 = vmul.f32 %v672, %v537
    %v1097 = vmul.f32 %v673, %v537
    %v1098 = vmul.f32 %v674, %v537
    %v1099 = vmul.f32 %v675, %v537
    %v1100 = vmul.f32 %v676, %v537
    %v1101 = vmul.f32 %v677, %v537
    %v1118 = vrot.slane %v1086, 2
    %v1119 = vrot.slane %v1087, 2
    %v1120 = vsel %vm225, %v1118, %v1119
    %v1121 = vrot.slane %v1088, 2
    %v1122 = vrot.slane %v1089, 2
    %v1123 = vsel %vm225, %v1121, %v1122
    %v1124 = vrot.slane %v1090, 2
    %v1125 = vrot.slane %v1091, 2
    %v1126 = vsel %vm225, %v1124, %v1125
    %v1127 = vrot.slane %v1092, 2
    %v1128 = vrot.slane %v1093, 2
    %v1129 = vsel %vm225, %v1127, %v1128
    %v1130 = vrot.slane %v1094, 2
    %v1131 = vrot.slane %v1095, 2
    %v1132 = vsel %vm225, %v1130, %v1131
    %v1133 = vrot.slane %v1096, 2
    %v1134 = vrot.slane %v1097, 2
    %v1135 = vsel %vm225, %v1133, %v1134
    %v1136 = vrot.slane %v1098, 2
    %v1137 = vrot.slane %v1099, 2
    %v1138 = vsel %vm225, %v1136, %v1137
    %v1139 = vrot.slane %v1100, 2
    %v1140 = vrot.slane %v1101, 2
    %v1141 = vsel %vm225, %v1139, %v1140
    %v1150 = vadd.f32 %v1078, %v1120
    %v1151 = vadd.f32 %v1079, %v1123
    %v1152 = vadd.f32 %v1080, %v1126
    %v1153 = vadd.f32 %v1081, %v1129
    %v1154 = vadd.f32 %v1082, %v1132
    %v1155 = vadd.f32 %v1083, %v1135
    %v1156 = vadd.f32 %v1084, %v1138
    %v1157 = vadd.f32 %v1085, %v1141
    %v1158 = vadd.f32 %v1150, %v614
    %v1159 = vadd.f32 %v1151, %v614
    %v1160 = vadd.f32 %v1152, %v614
    %v1161 = vadd.f32 %v1153, %v614
    %v1162 = vadd.f32 %v1154, %v614
    %v1163 = vadd.f32 %v1155, %v614
    %v1164 = vadd.f32 %v1156, %v614
    %v1165 = vadd.f32 %v1157, %v614
    %v1166 = vsel %vm29, %v1158, %v642
    %v1167 = vsel %vm29, %v1159, %v643
    %v1168 = vsel %vm29, %v1160, %v644
    %v1169 = vsel %vm29, %v1161, %v645
    %v1170 = vsel %vm29, %v1162, %v646
    %v1171 = vsel %vm29, %v1163, %v647
    %v1172 = vsel %vm29, %v1164, %v648
    %v1173 = vsel %vm29, %v1165, %v649
    %s1174 = scalar_lea.vmem [#allocation6], 64
    %1175 = vst.msk [vmem:[%s1174] sm:$0xff] %vm632, %v1166
    %1176 = vst.msk [vmem:[%s1174 + $0x8] sm:$0xff] %vm632, %v1167
    %1177 = vst.msk [vmem:[%s1174 + $0x10] sm:$0xff] %vm632, %v1168
    %1178 = vst.msk [vmem:[%s1174 + $0x18] sm:$0xff] %vm632, %v1169
    %1179 = vst.msk [vmem:[%s1174 + $0x20] sm:$0xff] %vm632, %v1170
    %1180 = vst.msk [vmem:[%s1174 + $0x28] sm:$0xff] %vm632, %v1171
    %1181 = vst.msk [vmem:[%s1174 + $0x30] sm:$0xff] %vm632, %v1172
    %1182 = vst.msk [vmem:[%s1174 + $0x38] sm:$0xff] %vm632, %v1173
    // Predicated region
    $region18: #{tpu_custom_call.1} parent=1 // pred_check
      _
    $region19: #{tpu_custom_call.1} parent=1 // pred_check_branch
      %1184 = sbr.rel (0) target = $region21
    $region20: #{tpu_custom_call.1} parent=1 // pred_region
      %s1186 = ssub.s32 2048, 2048
      %1187 = vsyncadd [#allocation5], %s1186
      %s1188 = sshll.u32 [#allocation6], 4
      %s1189 = int_to_ptr.vmem [resolvable:$true] %s1188
      %1194 = dma.vmem_to_hbm [thread:$0]  %s1189, 2048, %s3, [#allocation5], 128, 128, 8
    $region21: #{tpu_custom_call.1} parent=1 // pred_fallthru
      _
    // Predicated region
    $region22: #{tpu_custom_call.1} parent=1 // pred_check
      _
    $region23: #{tpu_custom_call.1} parent=1 // pred_check_branch
      %1196 = sbr.rel (0) target = $region25
    $region24: #{tpu_custom_call.1} parent=1 // pred_region
      %1197 = dma.done [#allocation5], 2048
    $region25: #{tpu_custom_call.1} parent=1 // pred_fallthru
      _
    %1198 = vsyncpa [#allocation4], 1
    %1199 = vsyncpa [#allocation5], 1

</llo_original>
